<compile_context>
chip_gen: v7x
topology: tpu7x:2x2x1
jax: 0.10.0
libtpu: 0.0.40
codegen_flags: <defaults>
</compile_context>

<pallas_src>
import functools

import numpy as np
import jax
import jax.numpy as jnp
from jax import lax
from jax.experimental import pallas as pl
from jax.experimental.pallas import tpu as pltpu


# ----------------------------- helpers ------------------------------------- #

def _round_up(x, m):
    return (x + m - 1) // m * m


@functools.lru_cache(maxsize=None)
def _vmem_caps():
    """(vmem_limit_bytes, tile_budget_bytes), generation-aware."""
    try:
        cap = int(pltpu.get_tpu_info().vmem_capacity_bytes)
    except Exception:
        cap = 64 * 1024 * 1024            # conservative (v7x-sized) fallback
    limit = min(int(cap * 0.75), cap - 8 * 1024 * 1024)
    budget = int(cap * 0.5)
    return limit, budget


@functools.lru_cache(maxsize=None)
def _buffered_one_supported():
    """Probe whether pipeline_mode=pl.Buffered(1) (single buffering for
    grid-invariant inputs) is accepted by this runtime."""
    try:
        def _probe(x_ref, o_ref):
            o_ref[...] = x_ref[...] + 1.0
        fn = pl.pallas_call(
            _probe,
            out_shape=jax.ShapeDtypeStruct((8, 128), jnp.float32),
            grid=(2,),
            in_specs=[pl.BlockSpec((8, 128), lambda i: (0, 0),
                                   pipeline_mode=pl.Buffered(1))],
            out_specs=pl.BlockSpec((8, 128), lambda i: (0, 0)),
        )
        jax.block_until_ready(fn(jnp.zeros((8, 128), jnp.float32)))
        return True
    except Exception:
        return False


def _invariant_kwargs():
    if _buffered_one_supported():
        return {"pipeline_mode": pl.Buffered(1)}
    return {}


def _choose_tile_d(n, d, budget, resident_bytes=0, temp_factor=8):
    """Feature-axis tile: a multiple of 128 dividing d (or d itself when
    d % 128 != 0), capped so the grid has >=2 (ideally >=4) steps, and the
    largest such tile whose per-step footprint fits the VMEM budget."""
    if d % 128 != 0:
        # Full-extent last dim (no padding copies).
        # TODO(synk): in-kernel lane-mask path so ragged D can still be tiled.
        return d
    if d >= 512:
        cap = d // 4
    elif d >= 256:
        cap = d // 2
    else:
        cap = d
    best = 128
    t = 128
    while t <= cap:
        if d % t == 0 and (temp_factor * n * t * 4 + resident_bytes) <= budget:
            best = t
        t += 128
    # TODO(synk): if even tile_d=128 exceeds the budget (very large N on v7x),
    # switch to an N-tiled two-pass (accumulate sums/sumsq, then normalize).
    return best


def _choose_tile_n(n, d, budget, temp_factor=6):
    n8 = max(_round_up(n, 8), 8)
    tile = 2048
    while tile > 8 and temp_factor * tile * d * 4 > budget:
        tile //= 2
    return min(tile, n8)


def _build_graph_tensors(batch_num_nodes):
    """Host-built, cacheable graphnorm auxiliaries: lane-dense transposed
    one-hot (bf16, exact for 0/1) and per-graph inverse node counts
    (0 for empty / padded graphs)."""
    batch = np.asarray(batch_num_nodes, dtype=np.int64)
    b = batch.shape[0]
    n = int(batch.sum())
    b_pad = _round_up(max(b, 1), 16)      # sublane-friendly for bf16 and f32
    seg = np.repeat(np.arange(b, dtype=np.int64), batch)
    onehot_t = np.zeros((b_pad, n), np.float32)
    onehot_t[seg, np.arange(n)] = 1.0
    counts = np.zeros((b_pad,), np.float32)
    counts[:b] = batch.astype(np.float32)
    inv_counts = np.where(counts > 0, 1.0 / np.maximum(counts, 1.0), 0.0)
    inv_counts = inv_counts.astype(np.float32).reshape(b_pad, 1)
    return jnp.asarray(onehot_t, dtype=jnp.bfloat16), jnp.asarray(inv_counts)


# ----------------------------- kernels ------------------------------------- #

_TN = (((0,), (0,)), ((), ()))   # contract dim 0 of both operands (lhs^T @ rhs)


def _graphnorm_kernel(onehot_t_ref, invc_ref, x_ref, w_ref, b_ref, ms_ref, o_ref):
    x = x_ref[...].astype(jnp.float32)               # (N, TD) feature tile
    oh_t = onehot_t_ref[...].astype(jnp.float32)     # (Bp, N) 0/1 (bf16 in HBM)
    inv_cnt = invc_ref[...]                          # (Bp, 1) 1/count (0: empty)

    # per-graph mean, scaled by mean_scale while still at (Bp, TD)
    sums = jnp.dot(oh_t, x, preferred_element_type=jnp.float32)       # (Bp, TD)
    mean_scaled = sums * inv_cnt * ms_ref[...]                        # (Bp, TD)
    # gather back per node with a TN contraction: no in-kernel transpose.
    sub = x - lax.dot_general(oh_t, mean_scaled, _TN,
                              preferred_element_type=jnp.float32)     # (N, TD)

    # per-graph inverse std of `sub` (biased, eps inside sqrt, as in the module)
    sqsum = jnp.dot(oh_t, sub * sub, preferred_element_type=jnp.float32)
    inv_std = lax.rsqrt(sqsum * inv_cnt + 1e-6)                       # (Bp, TD)
    inv_std_node = lax.dot_general(oh_t, inv_std, _TN,
                                   preferred_element_type=jnp.float32)

    o_ref[...] = (w_ref[...] * sub * inv_std_node + b_ref[...]).astype(o_ref.dtype)


def _layernorm_kernel(x_ref, w_ref, b_ref, o_ref):
    # nn.LayerNorm(hidden_dim): biased var over the last dim, eps=1e-5.
    # Single-pass E[x^2]-mean^2 (slightly less accurate for large-mean inputs).
    x = x_ref[...].astype(jnp.float32)
    inv_d = jnp.float32(1.0 / x.shape[-1])
    mean = jnp.sum(x, axis=-1, keepdims=True) * inv_d
    var = jnp.maximum(jnp.sum(x * x, axis=-1, keepdims=True) * inv_d - mean * mean, 0.0)
    o_ref[...] = ((x - mean) * lax.rsqrt(var + 1e-5) * w_ref[...]
                  + b_ref[...]).astype(o_ref.dtype)


def _batchnorm_kernel(x_ref, w_ref, b_ref, o_ref):
    # nn.BatchNorm1d(hidden_dim) training-mode forward: biased batch mean/var,
    # eps=1e-5, per feature tile. Single-pass statistics (one sweep per tile).
    # TODO(synk): eval-mode BatchNorm (running_mean/var buffers) not implemented.
    x = x_ref[...].astype(jnp.float32)
    inv_n = jnp.float32(1.0 / x.shape[0])
    mean = jnp.sum(x, axis=0, keepdims=True) * inv_n
    var = jnp.maximum(jnp.sum(x * x, axis=0, keepdims=True) * inv_n - mean * mean, 0.0)
    o_ref[...] = ((x - mean) * lax.rsqrt(var + 1e-5) * w_ref[...]
                  + b_ref[...]).astype(o_ref.dtype)


# ----------------------------- wrappers ------------------------------------- #

def graphnorm_pallas(x, onehot_t, inv_counts, weight_row, bias_row, mean_scale_row):
    # TODO(synk): for very large graph counts B (one-hot^T no longer fits VMEM)
    # switch to a PrefetchScalarGridSpec over contiguous per-graph offsets.
    n, d = x.shape
    b_pad = onehot_t.shape[0]
    limit, budget = _vmem_caps()
    resident = b_pad * n * (2 + 4)                      # bf16 block + f32 cast
    tile_d = _choose_tile_d(n, d, budget, resident_bytes=resident, temp_factor=8)
    inv_kw = _invariant_kwargs()
    ce = pl.CostEstimate(
        flops=int(6 * n * b_pad * d + 12 * n * d),
        transcendentals=int(b_pad * d),
        bytes_accessed=int(2 * n * d * 4 + b_pad * n * 2 + 3 * d * 4),
    )
    return pl.pallas_call(
        _graphnorm_kernel,
        out_shape=jax.ShapeDtypeStruct((n, d), x.dtype),
        grid=(d // tile_d,),
        in_specs=[
            pl.BlockSpec((b_pad, n), lambda j: (0, 0), **inv_kw),   # onehot^T
            pl.BlockSpec((b_pad, 1), lambda j: (0, 0), **inv_kw),   # 1/counts
            pl.BlockSpec((n, tile_d), lambda j: (0, j)),            # x tile
            pl.BlockSpec((1, tile_d), lambda j: (0, j)),            # weight
            pl.BlockSpec((1, tile_d), lambda j: (0, j)),            # bias
            pl.BlockSpec((1, tile_d), lambda j: (0, j)),            # mean_scale
        ],
        out_specs=pl.BlockSpec((n, tile_d), lambda j: (0, j)),
        compiler_params=pltpu.CompilerParams(
            dimension_semantics=("parallel",),
            vmem_limit_bytes=limit),
        cost_estimate=ce,
    )(onehot_t, inv_counts, x, weight_row, bias_row, mean_scale_row)


def layernorm_pallas(x, weight_row, bias_row):
    n, d = x.shape
    limit, budget = _vmem_caps()
    tile_n = _choose_tile_n(n, d, budget)
    inv_kw = _invariant_kwargs()
    ce = pl.CostEstimate(
        flops=int(8 * n * d),
        transcendentals=int(n),
        bytes_accessed=int(2 * n * d * 4 + 2 * d * 4),
    )
    return pl.pallas_call(
        _layernorm_kernel,
        out_shape=jax.ShapeDtypeStruct((n, d), x.dtype),
        grid=(pl.cdiv(n, tile_n),),
        in_specs=[
            pl.BlockSpec((tile_n, d), lambda i: (i, 0)),
            pl.BlockSpec((1, d), lambda i: (0, 0), **inv_kw),
            pl.BlockSpec((1, d), lambda i: (0, 0), **inv_kw),
        ],
        out_specs=pl.BlockSpec((tile_n, d), lambda i: (i, 0)),
        compiler_params=pltpu.CompilerParams(
            dimension_semantics=("parallel",),
            vmem_limit_bytes=limit),
        cost_estimate=ce,
    )(x, weight_row, bias_row)


def batchnorm_pallas(x, weight_row, bias_row):
    # TODO(synk): for N too large for a single (N, TILE_D) block, restructure as
    # a two-pass (sum/sumsq accumulate, then normalize) tiled reduction.
    n, d = x.shape
    limit, budget = _vmem_caps()
    tile_d = _choose_tile_d(n, d, budget, temp_factor=6)
    ce = pl.CostEstimate(
        flops=int(8 * n * d),
        transcendentals=int(d),
        bytes_accessed=int(2 * n * d * 4 + 2 * d * 4),
    )
    return pl.pallas_call(
        _batchnorm_kernel,
        out_shape=jax.ShapeDtypeStruct((n, d), x.dtype),
        grid=(d // tile_d,),
        in_specs=[
            pl.BlockSpec((n, tile_d), lambda j: (0, j)),
            pl.BlockSpec((1, tile_d), lambda j: (0, j)),
            pl.BlockSpec((1, tile_d), lambda j: (0, j)),
        ],
        out_specs=pl.BlockSpec((n, tile_d), lambda j: (0, j)),
        compiler_params=pltpu.CompilerParams(
            dimension_semantics=("parallel",),
            vmem_limit_bytes=limit),
        cost_estimate=ce,
    )(x, weight_row, bias_row)


# ----------------------------- module -------------------------------------- #

class Graph:
    def __init__(self, batch_num_nodes):
        self.batch_num_nodes = list(batch_num_nodes)


class NormLayer:
    """JAX/Pallas re-implementation of graphmae.utils.NormLayer (forward)."""

    def __init__(self, hidden_dim, norm_type):
        if norm_type not in ("batchnorm", "layernorm", "graphnorm"):
            raise NotImplementedError
        self.norm_type = norm_type
        self.hidden_dim = hidden_dim
        # default affine params of nn.BatchNorm1d / nn.LayerNorm / graphnorm
        self.weight = jnp.ones((hidden_dim,), jnp.float32)
        self.bias = jnp.zeros((hidden_dim,), jnp.float32)
        self._weight_row = self.weight.reshape(1, -1)
        self._bias_row = self.bias.reshape(1, -1)
        if norm_type == "graphnorm":
            self.mean_scale = jnp.ones((hidden_dim,), jnp.float32)
            self._mean_scale_row = self.mean_scale.reshape(1, -1)
        # cache: batch_num_nodes -> (onehot_t(bf16), inv_counts) device arrays
        self._graph_cache = {}

    def __call__(self, graph, x):
        if self.norm_type == "layernorm":
            return layernorm_pallas(x, self._weight_row, self._bias_row)
        if self.norm_type == "batchnorm":
            return batchnorm_pallas(x, self._weight_row, self._bias_row)
        key = tuple(int(v) for v in graph.batch_num_nodes)
        if key not in self._graph_cache:
            self._graph_cache[key] = _build_graph_tensors(key)
        onehot_t, inv_counts = self._graph_cache[key]
        return graphnorm_pallas(x, onehot_t, inv_counts,
                                self._weight_row, self._bias_row,
                                self._mean_scale_row)


# ----------------------------- references ----------------------------------- #

def _graphnorm_ref(x, batch_list, weight, bias, mean_scale):
    x = np.asarray(x, np.float32)
    seg = np.repeat(np.arange(len(batch_list)), batch_list)
    out = np.empty_like(x)
    for g, cnt in enumerate(batch_list):
        if cnt == 0:
            continue
        xs = x[seg == g]
        mean = xs.mean(axis=0)
        sub = xs - mean * np.asarray(mean_scale)
        std = np.sqrt((sub ** 2).mean(axis=0) + 1e-6)
        out[seg == g] = np.asarray(weight) * sub / std + np.asarray(bias)
    return out


def _layernorm_ref(x, weight, bias):
    x = np.asarray(x, np.float32)
    mean = x.mean(axis=-1, keepdims=True)
    var = ((x - mean) ** 2).mean(axis=-1, keepdims=True)
    return (x - mean) / np.sqrt(var + 1e-5) * weight + bias


def _batchnorm_ref(x, weight, bias):
    x = np.asarray(x, np.float32)
    mean = x.mean(axis=0, keepdims=True)
    var = ((x - mean) ** 2).mean(axis=0, keepdims=True)
    return (x - mean) / np.sqrt(var + 1e-5) * weight + bias


# ------------------------------- main ---------------------------------------- #

if __name__ == "__main__":
    hidden_dim = 32
    batch_num_nodes = [10, 6]            # 2 graphs, 16 nodes total
    n_nodes = sum(batch_num_nodes)

    key = jax.random.PRNGKey(0)
    x = jax.random.normal(key, (n_nodes, hidden_dim), dtype=jnp.float32)
    graph = Graph(batch_num_nodes)

    # graphnorm (the bespoke Pallas hot path)
    gn = NormLayer(hidden_dim, "graphnorm")
    out_gn = jax.block_until_ready(gn(graph, x))
    ref_gn = _graphnorm_ref(np.asarray(x), batch_num_nodes,
                            np.asarray(gn.weight), np.asarray(gn.bias),
                            np.asarray(gn.mean_scale))
    np.testing.assert_allclose(np.asarray(out_gn), ref_gn, rtol=1e-5, atol=1e-5)

    # second call exercises the cached one-hot^T / inverse-count tensors
    jax.block_until_ready(gn(graph, x))

    # layernorm / batchnorm variants (also Pallas kernels)
    ln = NormLayer(hidden_dim, "layernorm")
    out_ln = jax.block_until_ready(ln(graph, x))
    np.testing.assert_allclose(
        np.asarray(out_ln),
        _layernorm_ref(x, np.asarray(ln.weight), np.asarray(ln.bias)),
        rtol=1e-4, atol=1e-4)

    bn = NormLayer(hidden_dim, "batchnorm")
    out_bn = jax.block_until_ready(bn(graph, x))
    np.testing.assert_allclose(
        np.asarray(out_bn),
        _batchnorm_ref(x, np.asarray(bn.weight), np.asarray(bn.bias)),
        rtol=1e-4, atol=1e-4)

    print("KERNEL_OK")
</pallas_src>

<mosaic_0001>
module attributes {stable_mosaic.version = 11 : i64} {
  func.func @_probe(%arg0: i32, %arg1: memref<8x128xf32, #tpu.memory_space<vmem>>, %arg2: memref<8x128xf32, #tpu.memory_space<vmem>>) attributes {dimension_semantics = [#tpu.dimension_semantics<arbitrary>], iteration_bounds = array<i64: 2>, scalar_prefetch = 0 : i64, scratch_operands = 0 : i64, tpu.core_type = #tpu.core_type<tc>, window_params = [{pipeline_mode = #tpu.pipeline_mode<synchronous>, transform_indices = @transform_0, window_bounds = array<i64: 8, 128>}, {pipeline_mode = #tpu.pipeline_mode<synchronous>, transform_indices = @transform_1, window_bounds = array<i64: 8, 128>}]} {
    %c0 = arith.constant 0 : index
    %c0_0 = arith.constant 0 : index
    %0 = vector.load %arg1[%c0, %c0_0] : memref<8x128xf32, #tpu.memory_space<vmem>>, vector<8x128xf32>
    %cst = arith.constant 1.000000e+00 : f32
    %1 = vector.broadcast %cst : f32 to vector<8x128xf32>
    %2 = arith.addf %0, %1 : vector<8x128xf32>
    %c0_1 = arith.constant 0 : index
    %c0_2 = arith.constant 0 : index
    %3 = vector.load %arg2[%c0_1, %c0_2] : memref<8x128xf32, #tpu.memory_space<vmem>>, vector<8x128xf32>
    tpu.vector_store %arg2[%c0_1, %c0_2], %2 {strides = array<i32>} : memref<8x128xf32, #tpu.memory_space<vmem>>, vector<8x128xf32>,
    return
  }
  func.func @transform_0(%arg0: i32) -> (i32, i32) {
    %c0_i32 = arith.constant 0 : i32
    %c0_i32_0 = arith.constant 0 : i32
    %c0_i32_1 = arith.constant 0 : i32
    return %c0_i32, %c0_i32_0 : i32, i32
  }
  func.func @transform_1(%arg0: i32) -> (i32, i32) {
    %c0_i32 = arith.constant 0 : i32
    %c0_i32_0 = arith.constant 0 : i32
    %c0_i32_1 = arith.constant 0 : i32
    return %c0_i32, %c0_i32_0 : i32, i32
  }
}

module attributes {stable_mosaic.version = 11 : i64} {
  func.func @_graphnorm_kernel(%arg0: i32, %arg1: memref<16x16xbf16, #tpu.memory_space<vmem>>, %arg2: memref<16x1xf32, #tpu.memory_space<vmem>>, %arg3: memref<16x32xf32, #tpu.memory_space<vmem>>, %arg4: memref<1x32xf32, #tpu.memory_space<vmem>>, %arg5: memref<1x32xf32, #tpu.memory_space<vmem>>, %arg6: memref<1x32xf32, #tpu.memory_space<vmem>>, %arg7: memref<16x32xf32, #tpu.memory_space<vmem>>) attributes {dimension_semantics = [#tpu.dimension_semantics<parallel>], iteration_bounds = array<i64: 1>, scalar_prefetch = 0 : i64, scratch_operands = 0 : i64, tpu.core_type = #tpu.core_type<tc>, window_params = [{pipeline_mode = #tpu.pipeline_mode<synchronous>, transform_indices = @transform_0, window_bounds = array<i64: 16, 16>}, {pipeline_mode = #tpu.pipeline_mode<synchronous>, transform_indices = @transform_1, window_bounds = array<i64: 16, 1>}, {transform_indices = @transform_2, window_bounds = array<i64: 16, 32>}, {transform_indices = @transform_3, window_bounds = array<i64: 1, 32>}, {transform_indices = @transform_4, window_bounds = array<i64: 1, 32>}, {transform_indices = @transform_5, window_bounds = array<i64: 1, 32>}, {transform_indices = @transform_6, window_bounds = array<i64: 16, 32>}]} {
    %c0 = arith.constant 0 : index
    %c0_0 = arith.constant 0 : index
    %0 = vector.load %arg3[%c0, %c0_0] : memref<16x32xf32, #tpu.memory_space<vmem>>, vector<16x32xf32>
    %c0_1 = arith.constant 0 : index
    %c0_2 = arith.constant 0 : index
    %1 = vector.load %arg1[%c0_1, %c0_2] : memref<16x16xbf16, #tpu.memory_space<vmem>>, vector<16x16xbf16>
    %2 = arith.extf %1 : vector<16x16xbf16> to vector<16x16xf32>
    %c0_3 = arith.constant 0 : index
    %c0_4 = arith.constant 0 : index
    %3 = vector.load %arg2[%c0_3, %c0_4] : memref<16x1xf32, #tpu.memory_space<vmem>>, vector<16x1xf32>
    %cst = arith.constant dense<0.000000e+00> : vector<16x32xf32>
    %4 = tpu.matmul %2, %0, %cst {dimension_numbers = #tpu.dot_dimension_numbers<[1], [0], [0], [1], [0, 0, 1, 1], [], []>} : vector<16x16xf32>, vector<16x32xf32>, vector<16x32xf32> -> vector<16x32xf32>
    %5 = vector.broadcast %3 : vector<16x1xf32> to vector<16x32xf32>
    %6 = arith.mulf %4, %5 : vector<16x32xf32>
    %c0_5 = arith.constant 0 : index
    %c0_6 = arith.constant 0 : index
    %7 = vector.load %arg6[%c0_5, %c0_6] : memref<1x32xf32, #tpu.memory_space<vmem>>, vector<1x32xf32>
    %8 = vector.broadcast %7 : vector<1x32xf32> to vector<16x32xf32>
    %9 = arith.mulf %6, %8 : vector<16x32xf32>
    %cst_7 = arith.constant dense<0.000000e+00> : vector<16x32xf32>
    %10 = tpu.matmul %2, %9, %cst_7 {dimension_numbers = #tpu.dot_dimension_numbers<[0], [0], [1], [1], [0, 1, 1, 1], [], []>} : vector<16x16xf32>, vector<16x32xf32>, vector<16x32xf32> -> vector<16x32xf32>
    %11 = arith.subf %0, %10 : vector<16x32xf32>
    %12 = arith.mulf %11, %11 : vector<16x32xf32>
    %cst_8 = arith.constant dense<0.000000e+00> : vector<16x32xf32>
    %13 = tpu.matmul %2, %12, %cst_8 {dimension_numbers = #tpu.dot_dimension_numbers<[1], [0], [0], [1], [0, 0, 1, 1], [], []>} : vector<16x16xf32>, vector<16x32xf32>, vector<16x32xf32> -> vector<16x32xf32>
    %14 = vector.broadcast %3 : vector<16x1xf32> to vector<16x32xf32>
    %15 = arith.mulf %13, %14 : vector<16x32xf32>
    %cst_9 = arith.constant 9.99999997E-7 : f32
    %16 = vector.broadcast %cst_9 : f32 to vector<16x32xf32>
    %17 = arith.addf %15, %16 : vector<16x32xf32>
    %18 = math.rsqrt %17 : vector<16x32xf32>
    %cst_10 = arith.constant dense<0.000000e+00> : vector<16x32xf32>
    %19 = tpu.matmul %2, %18, %cst_10 {dimension_numbers = #tpu.dot_dimension_numbers<[0], [0], [1], [1], [0, 1, 1, 1], [], []>} : vector<16x16xf32>, vector<16x32xf32>, vector<16x32xf32> -> vector<16x32xf32>
    %c0_11 = arith.constant 0 : index
    %c0_12 = arith.constant 0 : index
    %20 = vector.load %arg4[%c0_11, %c0_12] : memref<1x32xf32, #tpu.memory_space<vmem>>, vector<1x32xf32>
    %21 = vector.broadcast %20 : vector<1x32xf32> to vector<16x32xf32>
    %22 = arith.mulf %21, %11 : vector<16x32xf32>
    %23 = arith.mulf %22, %19 : vector<16x32xf32>
    %c0_13 = arith.constant 0 : index
    %c0_14 = arith.constant 0 : index
    %24 = vector.load %arg5[%c0_13, %c0_14] : memref<1x32xf32, #tpu.memory_space<vmem>>, vector<1x32xf32>
    %25 = vector.broadcast %24 : vector<1x32xf32> to vector<16x32xf32>
    %26 = arith.addf %23, %25 : vector<16x32xf32>
    %c0_15 = arith.constant 0 : index
    %c0_16 = arith.constant 0 : index
    %27 = vector.load %arg7[%c0_15, %c0_16] : memref<16x32xf32, #tpu.memory_space<vmem>>, vector<16x32xf32>
    tpu.vector_store %arg7[%c0_15, %c0_16], %26 {strides = array<i32>} : memref<16x32xf32, #tpu.memory_space<vmem>>, vector<16x32xf32>,
    return
  }
  func.func @transform_0(%arg0: i32) -> (i32, i32) {
    %c0_i32 = arith.constant 0 : i32
    %c0_i32_0 = arith.constant 0 : i32
    %c0_i32_1 = arith.constant 0 : i32
    return %c0_i32, %c0_i32_0 : i32, i32
  }
  func.func @transform_1(%arg0: i32) -> (i32, i32) {
    %c0_i32 = arith.constant 0 : i32
    %c0_i32_0 = arith.constant 0 : i32
    %c0_i32_1 = arith.constant 0 : i32
    return %c0_i32, %c0_i32_0 : i32, i32
  }
  func.func @transform_2(%arg0: i32) -> (i32, i32) {
    %c0_i32 = arith.constant 0 : i32
    %c0_i32_0 = arith.constant 0 : i32
    return %c0_i32, %arg0 : i32, i32
  }
  func.func @transform_3(%arg0: i32) -> (i32, i32) {
    %c0_i32 = arith.constant 0 : i32
    %c0_i32_0 = arith.constant 0 : i32
    return %c0_i32, %arg0 : i32, i32
  }
  func.func @transform_4(%arg0: i32) -> (i32, i32) {
    %c0_i32 = arith.constant 0 : i32
    %c0_i32_0 = arith.constant 0 : i32
    return %c0_i32, %arg0 : i32, i32
  }
  func.func @transform_5(%arg0: i32) -> (i32, i32) {
    %c0_i32 = arith.constant 0 : i32
    %c0_i32_0 = arith.constant 0 : i32
    return %c0_i32, %arg0 : i32, i32
  }
  func.func @transform_6(%arg0: i32) -> (i32, i32) {
    %c0_i32 = arith.constant 0 : i32
    %c0_i32_0 = arith.constant 0 : i32
    return %c0_i32, %arg0 : i32, i32
  }
}

</mosaic_0001>

<llo_original>
// kernel: tpu_custom_call.1
$region0: #{tpu_custom_call.1}
  #allocation0 [shape = 'u32[]', space=smem, size = 0x4, offset = 0x4, fixed_abs, tag = 'smem constant byte address 0x4 - core index']
  #allocation1 [shape = 'u32[144,128]{1,0:T(1,128)}', space=vmem, size = 0x12000, scoped, tag = 'internal scratch']
  %s0 = inlined_call_operand.hbm [shape: f32[8,128], index: 0, kind: input, shape index: {}]
  %s1 = inlined_call_operand.hbm [shape: f32[8,128], index: 1, kind: output, shape index: {}]
  %s2 = sld [smem:[#allocation0]]
  $region41: #{tpu_custom_call.1} parent=0
    _
  %s4 = ssub.s32 1, %s2
  %s5 = scalar_select 0, %s4, %s2
  $region1: #{tpu_custom_call.1} parent=0
    #allocation2 [shape = 'u8[4096]{0}', space=vmem, size = 0x1000, scoped, tag = 'input window, operand 0, single buffered']
    #allocation3 [shape = 's32[2]{0}', space=sflag, size = 0x8, scoped, tag = 'scoped memory for tpu_custom_call.1']
    #allocation4 [shape = 's32[2]{0}', space=sflag, size = 0x8, scoped, tag = 'scoped memory for tpu_custom_call.1']
    #allocation5 [shape = 'u8[4096]{0}', space=vmem, size = 0x1000, scoped, tag = 'output window, operand 0, single buffered']
    %6 = vsyncpa [#allocation3], 0
    %7 = vsyncpa [#allocation4], 0
    loop: start=0, step=1, limit=4
    $region2: #{tpu_custom_call.1} parent=1 // loop_pre_header
      _
    $region3: #{tpu_custom_call.1} parent=1 // loop_header
      %s9 = sphi 0, %s13
      %p10 = scmp.ge.s32.totalorder %s9, 4
      %s17 = sphi 0, %s17
      %s19 = sphi 0, %s17
      %s20 = sphi 0, %s19
      %s34 = sphi 0, %s20
      %s38 = sphi 0, %s38
      %s40 = sphi 0, %s38
      %s41 = sphi 0, %s40
      %s55 = sphi 0, %s41
    $region4: #{tpu_custom_call.1} parent=1 // loop_header_branch
      %12 = sbr.rel (%p10) target = $region8
    $region5: #{tpu_custom_call.1} parent=1 // loop_body
      %s14 = ssub.s32 %s9, 1
      %s15 = ssub.s32 %s9, 2
      %s16 = sadd.s32 %s9, 1
      %s18 = sadd.s32 %s17, 1
      %p21 = scmp.eq.s32.totalorder %s9, 1
      %p22 = scmp.ne.s32.totalorder %s17, %s19
      %p23 = scmp.eq.s32.totalorder %s9, 0
      %p24 = por %p22, %p23
      %p25 = scmp.ne.s32.totalorder %s17, %s19
      %p26 = scmp.eq.s32.totalorder %s14, 1
      %p27 = por %p25, %p26
      %p28 = scmp.ne.s32.totalorder %s19, %s20
      %p29 = scmp.eq.s32.totalorder %s14, 0
      %p30 = por %p28, %p29
      %p31 = scmp.ne.s32.totalorder %s19, %s20
      %p32 = scmp.eq.s32.totalorder %s15, 1
      %p33 = por %p31, %p32
      %p35 = scmp.ne.s32.totalorder %s20, %s34
      %p36 = scmp.eq.s32.totalorder %s15, 0
      %p37 = por %p35, %p36
      %s39 = sadd.s32 %s38, 1
      %p42 = scmp.eq.s32.totalorder %s9, 1
      %p43 = scmp.ne.s32.totalorder %s38, %s40
      %p44 = scmp.eq.s32.totalorder %s9, 0
      %p45 = por %p43, %p44
      %p46 = scmp.ne.s32.totalorder %s38, %s40
      %p47 = scmp.eq.s32.totalorder %s14, 1
      %p48 = por %p46, %p47
      %p49 = scmp.ne.s32.totalorder %s40, %s41
      %p50 = scmp.eq.s32.totalorder %s14, 0
      %p51 = por %p49, %p50
      %p52 = scmp.ne.s32.totalorder %s40, %s41
      %p53 = scmp.eq.s32.totalorder %s15, 1
      %p54 = por %p52, %p53
      %p56 = scmp.ne.s32.totalorder %s41, %s55
      %p57 = scmp.eq.s32.totalorder %s15, 0
      %p58 = por %p56, %p57
      %p59 = scmp.le.s32.totalorder 1, %s9
      %p60 = scmp.lt.s32.totalorder %s9, 3
      %p61 = pnand %p59, %p60
      %p62 = pneg %p61
      // Predicated region
      $region9: #{tpu_custom_call.1} parent=5 // pred_check
        _
      $region10: #{tpu_custom_call.1} parent=5 // pred_check_branch
        %64 = sbr.rel (%p61) target = $region12
      $region11: #{tpu_custom_call.1} parent=5 // pred_region
        %s65 = ssub.s32 %s9, 1
        // Predicated region
        $region13: #{tpu_custom_call.1} parent=11 // pred_check
          %p66 = pneg %p30
        $region14: #{tpu_custom_call.1} parent=11 // pred_check_branch
          %68 = sbr.rel (%p66) target = $region16
        $region15: #{tpu_custom_call.1} parent=11 // pred_region
          %s70 = ssub.s32 128, 128
          %71 = vsyncadd [#allocation3], %s70
          %s73 = sshll.u32 [#allocation2], 4
          %s74 = int_to_ptr.vmem [resolvable:$true] %s73
          %76 = dma.hbm_to_vmem [thread:$0]  %s0, 128, %s74, [#allocation3]
        $region16: #{tpu_custom_call.1} parent=11 // pred_fallthru
          _
      $region12: #{tpu_custom_call.1} parent=5 // pred_fallthru
        _
      %p77 = scmp.lt.s32.totalorder %s9, 2
      // Predicated region
      $region17: #{tpu_custom_call.1} parent=5 // pred_check
        %p78 = pneg %p77
      $region18: #{tpu_custom_call.1} parent=5 // pred_check_branch
        %80 = sbr.rel (%p78) target = $region20
      $region19: #{tpu_custom_call.1} parent=5 // pred_region
        _
      $region20: #{tpu_custom_call.1} parent=5 // pred_fallthru
        _
      %p81 = scmp.le.s32.totalorder 1, %s9
      %p82 = scmp.lt.s32.totalorder %s9, 3
      %p83 = pnand %p81, %p82
      %p84 = pneg %p83
      // Predicated region
      $region21: #{tpu_custom_call.1} parent=5 // pred_check
        _
      $region22: #{tpu_custom_call.1} parent=5 // pred_check_branch
        %86 = sbr.rel (%p83) target = $region24
      $region23: #{tpu_custom_call.1} parent=5 // pred_region
        %s87 = ssub.s32 %s9, 1
        // Predicated region
        $region25: #{tpu_custom_call.1} parent=23 // pred_check
          %p88 = pneg %p30
        $region26: #{tpu_custom_call.1} parent=23 // pred_check_branch
          %90 = sbr.rel (%p88) target = $region28
        $region27: #{tpu_custom_call.1} parent=23 // pred_region
          %91 = dma.done [#allocation3], 128
        $region28: #{tpu_custom_call.1} parent=23 // pred_fallthru
          _
        %p92 = pneg %p30
        %p93 = pneg %p27
        %p94 = pneg %p51
        %p95 = pneg %p48
        %v96 = vld [vmem:[#allocation2] sm:$0xff]
        %v97 = vadd.f32 %v96, 1.0
        %98 = vst [vmem:[#allocation5] sm:$0xff] %v97
        // Predicated region
        $region29: #{tpu_custom_call.1} parent=23 // pred_check
          %p99 = pneg %p48
        $region30: #{tpu_custom_call.1} parent=23 // pred_check_branch
          %101 = sbr.rel (%p99) target = $region32
        $region31: #{tpu_custom_call.1} parent=23 // pred_region
          %s103 = ssub.s32 128, 128
          %104 = vsyncadd [#allocation4], %s103
          %s106 = sshll.u32 [#allocation5], 4
          %s107 = int_to_ptr.vmem [resolvable:$true] %s106
          %109 = dma.vmem_to_hbm [thread:$0]  %s107, 128, %s1, [#allocation4]
        $region32: #{tpu_custom_call.1} parent=23 // pred_fallthru
          _
        // Predicated region
        $region33: #{tpu_custom_call.1} parent=23 // pred_check
          %p110 = pneg %p48
        $region34: #{tpu_custom_call.1} parent=23 // pred_check_branch
          %112 = sbr.rel (%p110) target = $region36
        $region35: #{tpu_custom_call.1} parent=23 // pred_region
          %113 = dma.done [#allocation4], 128
        $region36: #{tpu_custom_call.1} parent=23 // pred_fallthru
          _
      $region24: #{tpu_custom_call.1} parent=5 // pred_fallthru
        _
      %p114 = scmp.le.s32.totalorder 2, %s9
      // Predicated region
      $region37: #{tpu_custom_call.1} parent=5 // pred_check
        %p115 = pneg %p114
      $region38: #{tpu_custom_call.1} parent=5 // pred_check_branch
        %117 = sbr.rel (%p115) target = $region40
      $region39: #{tpu_custom_call.1} parent=5 // pred_region
        %s118 = ssub.s32 %s9, 2
      $region40: #{tpu_custom_call.1} parent=5 // pred_fallthru
        _
    $region6: #{tpu_custom_call.1} parent=1 // loop_footer
      %s13 = sadd.s32 1, %s9
    $region7: #{tpu_custom_call.1} parent=1 // loop_footer_branch
      %8 = sbr.rel target = $region3
    $region8: #{tpu_custom_call.1} parent=1 // loop_exit
      _
    %119 = vsyncpa [#allocation3], 1
    %s120 = scalar_lea.sflag [#allocation3], 1
    %121 = vsyncpa %s120, 1
    %122 = vsyncpa [#allocation4], 1
    %s123 = scalar_lea.sflag [#allocation4], 1
    %124 = vsyncpa %s123, 1

// kernel: tpu_custom_call.1
$region0: #{tpu_custom_call.1}
  #allocation0 [shape = 'u32[]', space=smem, size = 0x4, offset = 0x4, fixed_abs, tag = 'smem constant byte address 0x4 - core index']
  #allocation1 [shape = 'u32[144,128]{1,0:T(1,128)}', space=vmem, size = 0x12000, scoped, tag = 'internal scratch']
  %s0 = inlined_call_operand.vmem [shape: bf16[16,16], index: 0, kind: input, shape index: {}]
  %s1 = inlined_call_operand.vmem [shape: f32[16,1], index: 1, kind: input, shape index: {}]
  %s2 = inlined_call_operand.vmem [shape: f32[16,32], index: 2, kind: input, shape index: {}]
  %s3 = inlined_call_operand.vmem [shape: f32[1,32], index: 3, kind: input, shape index: {}]
  %s4 = inlined_call_operand.vmem [shape: f32[1,32], index: 4, kind: input, shape index: {}]
  %s5 = inlined_call_operand.vmem [shape: f32[1,32], index: 5, kind: input, shape index: {}]
  %s6 = inlined_call_operand.hbm [shape: f32[16,32], index: 6, kind: output, shape index: {}]
  %s7 = sld [smem:[#allocation0]]
  $region34: #{tpu_custom_call.1} parent=0
    _
  %s9 = ssub.s32 1, %s7
  %s10 = scalar_select 0, %s9, %s7
  $region1: #{tpu_custom_call.1} parent=0
    #allocation2 [shape = 'u8[8192]{0}', space=vmem, size = 0x2000, scoped, tag = 'output window, operand 0, single buffered']
    #allocation3 [shape = 's32[1]{0}', space=sflag, size = 0x4, scoped, tag = 'scoped memory for tpu_custom_call.1']
    %11 = vsyncpa [#allocation3], 0
    // Predicated region
    $region2: #{tpu_custom_call.1} parent=1 // pred_check
      _
    $region3: #{tpu_custom_call.1} parent=1 // pred_check_branch
      %13 = sbr.rel (0) target = $region5
    $region4: #{tpu_custom_call.1} parent=1 // pred_region
      _
    $region5: #{tpu_custom_call.1} parent=1 // pred_fallthru
      _
    // Predicated region
    $region6: #{tpu_custom_call.1} parent=1 // pred_check
      _
    $region7: #{tpu_custom_call.1} parent=1 // pred_check_branch
      %15 = sbr.rel (0) target = $region9
    $region8: #{tpu_custom_call.1} parent=1 // pred_region
      _
    $region9: #{tpu_custom_call.1} parent=1 // pred_fallthru
      _
    // Predicated region
    $region10: #{tpu_custom_call.1} parent=1 // pred_check
      _
    $region11: #{tpu_custom_call.1} parent=1 // pred_check_branch
      %17 = sbr.rel (0) target = $region13
    $region12: #{tpu_custom_call.1} parent=1 // pred_region
      _
    $region13: #{tpu_custom_call.1} parent=1 // pred_fallthru
      _
    // Predicated region
    $region14: #{tpu_custom_call.1} parent=1 // pred_check
      _
    $region15: #{tpu_custom_call.1} parent=1 // pred_check_branch
      %19 = sbr.rel (0) target = $region17
    $region16: #{tpu_custom_call.1} parent=1 // pred_region
      _
    $region17: #{tpu_custom_call.1} parent=1 // pred_fallthru
      _
    // Predicated region
    $region18: #{tpu_custom_call.1} parent=1 // pred_check
      _
    $region19: #{tpu_custom_call.1} parent=1 // pred_check_branch
      %21 = sbr.rel (0) target = $region21
    $region20: #{tpu_custom_call.1} parent=1 // pred_region
      _
    $region21: #{tpu_custom_call.1} parent=1 // pred_fallthru
      _
    // Predicated region
    $region22: #{tpu_custom_call.1} parent=1 // pred_check
      _
    $region23: #{tpu_custom_call.1} parent=1 // pred_check_branch
      %23 = sbr.rel (0) target = $region25
    $region24: #{tpu_custom_call.1} parent=1 // pred_region
      _
    $region25: #{tpu_custom_call.1} parent=1 // pred_fallthru
      _
    %v24 = vld [vmem:[%s2] sm:$0xff]
    %v25 = vld [vmem:[%s2 + $0x8] sm:$0xff]
    %v26 = vld [vmem:[%s0] sm:$0xf]
    %v27 = vld [vmem:[%s0 + $0x4] sm:$0xf]
    %v28 = vunpack.c.l.bf16 %v26
    %v29 = vunpack.c.l.bf16 %v27
    %v30 = vld [vmem:[%s1] sm:$0xff]
    %v31 = vld [vmem:[%s1 + $0x8] sm:$0xff]
    %vm32 = vcmask 130048
    %v34 = vsel %vm32, %v28, 0
    %v37 = vsel %vm32, %v29, 0
    %39 = vmatprep.subr.mxu0 0.0
    %40 = vmatpush1.msra.mxu0 %v24
    %41 = vmatprep.subr.mxu0 0.0
    %42 = vmatpush1.msra.mxu0 %v25
    %43 = vmatprep.subr.mxu0 0.0
    %44 = vmatpush1.msra.mxu0 0.0
    %45 = vmatprep.subr.mxu0 0.0
    %46 = vmatpush1.msra.mxu0 0.0
    %47 = vmatprep.subr.mxu0 0.0
    %48 = vmatpush1.msra.mxu0 0.0
    %49 = vmatprep.subr.mxu0 0.0
    %50 = vmatpush1.msra.mxu0 0.0
    %51 = vmatprep.subr.mxu0 0.0
    %52 = vmatpush1.msra.mxu0 0.0
    %53 = vmatprep.subr.mxu0 0.0
    %54 = vmatpush1.msra.mxu0 0.0
    %55 = vmatprep.subr.mxu0 0.0
    %56 = vmatpush1.msra.mxu0 0.0
    %57 = vmatprep.subr.mxu0 0.0
    %58 = vmatpush1.msra.mxu0 0.0
    %59 = vmatprep.subr.mxu0 0.0
    %60 = vmatpush1.msra.mxu0 0.0
    %61 = vmatprep.subr.mxu0 0.0
    %62 = vmatpush1.msra.mxu0 0.0
    %63 = vmatprep.subr.mxu0 0.0
    %64 = vmatpush1.msra.mxu0 0.0
    %65 = vmatprep.subr.mxu0 0.0
    %66 = vmatpush1.msra.mxu0 0.0
    %67 = vmatprep.subr.mxu0 0.0
    %68 = vmatpush1.msra.mxu0 0.0
    %69 = vmatprep.subr.mxu0 0.0
    %70 = vmatpush1.msra.mxu0 0.0
    %71 = vmatprep.subr.mxu0 0.0
    %72 = vmatpush1.msra.mxu0 0.0
    %73 = vmatprep.subr.mxu0 0.0
    %74 = vmatpush1.msra.mxu0 0.0
    %75 = vmatprep.subr.mxu0 0.0
    %76 = vmatpush1.msra.mxu0 0.0
    %77 = vmatprep.subr.mxu0 0.0
    %78 = vmatpush1.msra.mxu0 0.0
    %79 = vmatprep.subr.mxu0 0.0
    %80 = vmatpush1.msra.mxu0 0.0
    %81 = vmatprep.subr.mxu0 0.0
    %82 = vmatpush1.msra.mxu0 0.0
    %83 = vmatprep.subr.mxu0 0.0
    %84 = vmatpush1.msra.mxu0 0.0
    %85 = vmatprep.subr.mxu0 0.0
    %86 = vmatpush1.msra.mxu0 0.0
    %87 = vmatprep.subr.mxu0 0.0
    %88 = vmatpush1.msra.mxu0 0.0
    %89 = vmatprep.subr.mxu0 0.0
    %90 = vmatpush1.msra.mxu0 0.0
    %91 = vmatprep.subr.mxu0 0.0
    %92 = vmatpush1.msra.mxu0 0.0
    %93 = vmatprep.subr.mxu0 0.0
    %94 = vmatpush1.msra.mxu0 0.0
    %95 = vmatprep.subr.mxu0 0.0
    %96 = vmatpush1.msra.mxu0 0.0
    %97 = vmatprep.subr.mxu0 0.0
    %98 = vmatpush1.msra.mxu0 0.0
    %99 = vmatprep.subr.mxu0 0.0
    %100 = vmatpush1.msra.mxu0 0.0
    %101 = vmatprep.subr.mxu0 0.0
    %102 = vmatpush1.msra.mxu0 0.0
    %103 = vmatprep.mubr.f32.mxu0 0.0
    %104 = vmatmul.mubr.f32.gmra.mrb[0].mxu0 %v34
    %v105 = vpop.f32.mrb[0].mxu0
    %v106 = vadd.f32 0.0, %v105
    %v107 = vpop.f32.mrb[0].mxu0
    %108 = vmatprep.mubr.f32.mxu0 0.0
    %109 = vmatmul.mubr.f32.gmra.mrb[0].mxu0 %v37
    %v110 = vpop.f32.mrb[0].mxu0
    %v111 = vadd.f32 0.0, %v110
    %v112 = vpop.f32.mrb[0].mxu0
    %113 = vdwg.mxu0
    %115 = vset.pattern.permute.xlu0 0
    %116 = vperm.xlu0 %115, %v30
    %v117 = vpop.permute.xlu0 %116
    %120 = vset.pattern.permute.xlu0 0
    %121 = vperm.xlu0 %120, %v31
    %v122 = vpop.permute.xlu0 %121
    %v124 = vmul.f32 %v106, %v117
    %v125 = vmul.f32 %v111, %v122
    %v126 = vld [vmem:[%s5] sm:$0x1]
    %v128 = vlaneseq
    %v129 = vshrl.u32 %v128, 7
    %v130 = vsub.s32 0, %v129
    %v131 = vrot.slane %v126, %v130
    %v133 = vmul.f32 %v124, %v131
    %v134 = vmul.f32 %v125, %v131
    %135 = vxpose.xlu0.b32.start [1/16] %v28, 128
    %136 = vxpose.xlu0.b32.cont [2/16] %v29, 128
    %137 = vxpose.xlu0.b32.cont [3/16] 0.0, 128
    %138 = vxpose.xlu0.b32.cont [4/16] 0.0, 128
    %139 = vxpose.xlu0.b32.cont [5/16] 0.0, 128
    %140 = vxpose.xlu0.b32.cont [6/16] 0.0, 128
    %141 = vxpose.xlu0.b32.cont [7/16] 0.0, 128
    %142 = vxpose.xlu0.b32.cont [8/16] 0.0, 128
    %143 = vxpose.xlu0.b32.cont [9/16] 0.0, 128
    %144 = vxpose.xlu0.b32.cont [10/16] 0.0, 128
    %145 = vxpose.xlu0.b32.cont [11/16] 0.0, 128
    %146 = vxpose.xlu0.b32.cont [12/16] 0.0, 128
    %147 = vxpose.xlu0.b32.cont [13/16] 0.0, 128
    %148 = vxpose.xlu0.b32.cont [14/16] 0.0, 128
    %149 = vxpose.xlu0.b32.cont [15/16] 0.0, 128
    %150 = vxpose.xlu0.b32.end [16/16] 0.0, 128
    %v151 = vpop.trf.xlu0
    %v152 = vpop.trf.xlu0
    %v153 = vpop.trf.xlu0
    %v154 = vpop.trf.xlu0
    %v155 = vpop.trf.xlu0
    %v156 = vpop.trf.xlu0
    %v157 = vpop.trf.xlu0
    %v158 = vpop.trf.xlu0
    %v159 = vpop.trf.xlu0
    %v160 = vpop.trf.xlu0
    %v161 = vpop.trf.xlu0
    %v162 = vpop.trf.xlu0
    %v163 = vpop.trf.xlu0
    %v164 = vpop.trf.xlu0
    %v165 = vpop.trf.xlu0
    %v166 = vpop.trf.xlu0
    %v168 = vsel %vm32, %v151, 0
    %v171 = vsel %vm32, %v152, 0
    %173 = vmatprep.subr.mxu0 0.0
    %174 = vmatpush1.msra.mxu0 %v133
    %175 = vmatprep.subr.mxu0 0.0
    %176 = vmatpush1.msra.mxu0 %v134
    %177 = vmatprep.subr.mxu0 0.0
    %178 = vmatpush1.msra.mxu0 0.0
    %179 = vmatprep.subr.mxu0 0.0
    %180 = vmatpush1.msra.mxu0 0.0
    %181 = vmatprep.subr.mxu0 0.0
    %182 = vmatpush1.msra.mxu0 0.0
    %183 = vmatprep.subr.mxu0 0.0
    %184 = vmatpush1.msra.mxu0 0.0
    %185 = vmatprep.subr.mxu0 0.0
    %186 = vmatpush1.msra.mxu0 0.0
    %187 = vmatprep.subr.mxu0 0.0
    %188 = vmatpush1.msra.mxu0 0.0
    %189 = vmatprep.subr.mxu0 0.0
    %190 = vmatpush1.msra.mxu0 0.0
    %191 = vmatprep.subr.mxu0 0.0
    %192 = vmatpush1.msra.mxu0 0.0
    %193 = vmatprep.subr.mxu0 0.0
    %194 = vmatpush1.msra.mxu0 0.0
    %195 = vmatprep.subr.mxu0 0.0
    %196 = vmatpush1.msra.mxu0 0.0
    %197 = vmatprep.subr.mxu0 0.0
    %198 = vmatpush1.msra.mxu0 0.0
    %199 = vmatprep.subr.mxu0 0.0
    %200 = vmatpush1.msra.mxu0 0.0
    %201 = vmatprep.subr.mxu0 0.0
    %202 = vmatpush1.msra.mxu0 0.0
    %203 = vmatprep.subr.mxu0 0.0
    %204 = vmatpush1.msra.mxu0 0.0
    %205 = vmatprep.subr.mxu0 0.0
    %206 = vmatpush1.msra.mxu0 0.0
    %207 = vmatprep.subr.mxu0 0.0
    %208 = vmatpush1.msra.mxu0 0.0
    %209 = vmatprep.subr.mxu0 0.0
    %210 = vmatpush1.msra.mxu0 0.0
    %211 = vmatprep.subr.mxu0 0.0
    %212 = vmatpush1.msra.mxu0 0.0
    %213 = vmatprep.subr.mxu0 0.0
    %214 = vmatpush1.msra.mxu0 0.0
    %215 = vmatprep.subr.mxu0 0.0
    %216 = vmatpush1.msra.mxu0 0.0
    %217 = vmatprep.subr.mxu0 0.0
    %218 = vmatpush1.msra.mxu0 0.0
    %219 = vmatprep.subr.mxu0 0.0
    %220 = vmatpush1.msra.mxu0 0.0
    %221 = vmatprep.subr.mxu0 0.0
    %222 = vmatpush1.msra.mxu0 0.0
    %223 = vmatprep.subr.mxu0 0.0
    %224 = vmatpush1.msra.mxu0 0.0
    %225 = vmatprep.subr.mxu0 0.0
    %226 = vmatpush1.msra.mxu0 0.0
    %227 = vmatprep.subr.mxu0 0.0
    %228 = vmatpush1.msra.mxu0 0.0
    %229 = vmatprep.subr.mxu0 0.0
    %230 = vmatpush1.msra.mxu0 0.0
    %231 = vmatprep.subr.mxu0 0.0
    %232 = vmatpush1.msra.mxu0 0.0
    %233 = vmatprep.subr.mxu0 0.0
    %234 = vmatpush1.msra.mxu0 0.0
    %235 = vmatprep.subr.mxu0 0.0
    %236 = vmatpush1.msra.mxu0 0.0
    %237 = vmatprep.mubr.f32.mxu0 0.0
    %238 = vmatmul.mubr.f32.gmra.mrb[0].mxu0 %v168
    %v239 = vpop.f32.mrb[0].mxu0
    %v240 = vadd.f32 0.0, %v239
    %v241 = vpop.f32.mrb[0].mxu0
    %242 = vmatprep.mubr.f32.mxu0 0.0
    %243 = vmatmul.mubr.f32.gmra.mrb[0].mxu0 %v171
    %v244 = vpop.f32.mrb[0].mxu0
    %v245 = vadd.f32 0.0, %v244
    %v246 = vpop.f32.mrb[0].mxu0
    %247 = vdwg.mxu0
    %v248 = vsub.f32 %v24, %v240
    %v249 = vsub.f32 %v25, %v245
    %v250 = vmul.f32 %v248, %v248
    %v251 = vmul.f32 %v249, %v249
    %252 = vmatprep.subr.mxu0 0.0
    %253 = vmatpush1.msra.mxu0 %v250
    %254 = vmatprep.subr.mxu0 0.0
    %255 = vmatpush1.msra.mxu0 %v251
    %256 = vmatprep.subr.mxu0 0.0
    %257 = vmatpush1.msra.mxu0 0.0
    %258 = vmatprep.subr.mxu0 0.0
    %259 = vmatpush1.msra.mxu0 0.0
    %260 = vmatprep.subr.mxu0 0.0
    %261 = vmatpush1.msra.mxu0 0.0
    %262 = vmatprep.subr.mxu0 0.0
    %263 = vmatpush1.msra.mxu0 0.0
    %264 = vmatprep.subr.mxu0 0.0
    %265 = vmatpush1.msra.mxu0 0.0
    %266 = vmatprep.subr.mxu0 0.0
    %267 = vmatpush1.msra.mxu0 0.0
    %268 = vmatprep.subr.mxu0 0.0
    %269 = vmatpush1.msra.mxu0 0.0
    %270 = vmatprep.subr.mxu0 0.0
    %271 = vmatpush1.msra.mxu0 0.0
    %272 = vmatprep.subr.mxu0 0.0
    %273 = vmatpush1.msra.mxu0 0.0
    %274 = vmatprep.subr.mxu0 0.0
    %275 = vmatpush1.msra.mxu0 0.0
    %276 = vmatprep.subr.mxu0 0.0
    %277 = vmatpush1.msra.mxu0 0.0
    %278 = vmatprep.subr.mxu0 0.0
    %279 = vmatpush1.msra.mxu0 0.0
    %280 = vmatprep.subr.mxu0 0.0
    %281 = vmatpush1.msra.mxu0 0.0
    %282 = vmatprep.subr.mxu0 0.0
    %283 = vmatpush1.msra.mxu0 0.0
    %284 = vmatprep.subr.mxu0 0.0
    %285 = vmatpush1.msra.mxu0 0.0
    %286 = vmatprep.subr.mxu0 0.0
    %287 = vmatpush1.msra.mxu0 0.0
    %288 = vmatprep.subr.mxu0 0.0
    %289 = vmatpush1.msra.mxu0 0.0
    %290 = vmatprep.subr.mxu0 0.0
    %291 = vmatpush1.msra.mxu0 0.0
    %292 = vmatprep.subr.mxu0 0.0
    %293 = vmatpush1.msra.mxu0 0.0
    %294 = vmatprep.subr.mxu0 0.0
    %295 = vmatpush1.msra.mxu0 0.0
    %296 = vmatprep.subr.mxu0 0.0
    %297 = vmatpush1.msra.mxu0 0.0
    %298 = vmatprep.subr.mxu0 0.0
    %299 = vmatpush1.msra.mxu0 0.0
    %300 = vmatprep.subr.mxu0 0.0
    %301 = vmatpush1.msra.mxu0 0.0
    %302 = vmatprep.subr.mxu0 0.0
    %303 = vmatpush1.msra.mxu0 0.0
    %304 = vmatprep.subr.mxu0 0.0
    %305 = vmatpush1.msra.mxu0 0.0
    %306 = vmatprep.subr.mxu0 0.0
    %307 = vmatpush1.msra.mxu0 0.0
    %308 = vmatprep.subr.mxu0 0.0
    %309 = vmatpush1.msra.mxu0 0.0
    %310 = vmatprep.subr.mxu0 0.0
    %311 = vmatpush1.msra.mxu0 0.0
    %312 = vmatprep.subr.mxu0 0.0
    %313 = vmatpush1.msra.mxu0 0.0
    %314 = vmatprep.subr.mxu0 0.0
    %315 = vmatpush1.msra.mxu0 0.0
    %316 = vmatprep.mubr.f32.mxu0 0.0
    %317 = vmatmul.mubr.f32.gmra.mrb[0].mxu0 %v34
    %v318 = vpop.f32.mrb[0].mxu0
    %v319 = vadd.f32 0.0, %v318
    %v320 = vpop.f32.mrb[0].mxu0
    %321 = vmatprep.mubr.f32.mxu0 0.0
    %322 = vmatmul.mubr.f32.gmra.mrb[0].mxu0 %v37
    %v323 = vpop.f32.mrb[0].mxu0
    %v324 = vadd.f32 0.0, %v323
    %v325 = vpop.f32.mrb[0].mxu0
    %326 = vdwg.mxu0
    %v327 = vmul.f32 %v319, %v117
    %v328 = vmul.f32 %v324, %v122
    %v329 = vadd.f32 %v327, 1e-06
    %v330 = vadd.f32 %v328, 1e-06
    %v331 = vrsqrt.pop %v329
    %v332 = vrsqrt.pop %v330
    %333 = vmatprep.subr.mxu0 0.0
    %334 = vmatpush1.msra.mxu0 %v331
    %335 = vmatprep.subr.mxu0 0.0
    %336 = vmatpush1.msra.mxu0 %v332
    %337 = vmatprep.subr.mxu0 0.0
    %338 = vmatpush1.msra.mxu0 0.0
    %339 = vmatprep.subr.mxu0 0.0
    %340 = vmatpush1.msra.mxu0 0.0
    %341 = vmatprep.subr.mxu0 0.0
    %342 = vmatpush1.msra.mxu0 0.0
    %343 = vmatprep.subr.mxu0 0.0
    %344 = vmatpush1.msra.mxu0 0.0
    %345 = vmatprep.subr.mxu0 0.0
    %346 = vmatpush1.msra.mxu0 0.0
    %347 = vmatprep.subr.mxu0 0.0
    %348 = vmatpush1.msra.mxu0 0.0
    %349 = vmatprep.subr.mxu0 0.0
    %350 = vmatpush1.msra.mxu0 0.0
    %351 = vmatprep.subr.mxu0 0.0
    %352 = vmatpush1.msra.mxu0 0.0
    %353 = vmatprep.subr.mxu0 0.0
    %354 = vmatpush1.msra.mxu0 0.0
    %355 = vmatprep.subr.mxu0 0.0
    %356 = vmatpush1.msra.mxu0 0.0
    %357 = vmatprep.subr.mxu0 0.0
    %358 = vmatpush1.msra.mxu0 0.0
    %359 = vmatprep.subr.mxu0 0.0
    %360 = vmatpush1.msra.mxu0 0.0
    %361 = vmatprep.subr.mxu0 0.0
    %362 = vmatpush1.msra.mxu0 0.0
    %363 = vmatprep.subr.mxu0 0.0
    %364 = vmatpush1.msra.mxu0 0.0
    %365 = vmatprep.subr.mxu0 0.0
    %366 = vmatpush1.msra.mxu0 0.0
    %367 = vmatprep.subr.mxu0 0.0
    %368 = vmatpush1.msra.mxu0 0.0
    %369 = vmatprep.subr.mxu0 0.0
    %370 = vmatpush1.msra.mxu0 0.0
    %371 = vmatprep.subr.mxu0 0.0
    %372 = vmatpush1.msra.mxu0 0.0
    %373 = vmatprep.subr.mxu0 0.0
    %374 = vmatpush1.msra.mxu0 0.0
    %375 = vmatprep.subr.mxu0 0.0
    %376 = vmatpush1.msra.mxu0 0.0
    %377 = vmatprep.subr.mxu0 0.0
    %378 = vmatpush1.msra.mxu0 0.0
    %379 = vmatprep.subr.mxu0 0.0
    %380 = vmatpush1.msra.mxu0 0.0
    %381 = vmatprep.subr.mxu0 0.0
    %382 = vmatpush1.msra.mxu0 0.0
    %383 = vmatprep.subr.mxu0 0.0
    %384 = vmatpush1.msra.mxu0 0.0
    %385 = vmatprep.subr.mxu0 0.0
    %386 = vmatpush1.msra.mxu0 0.0
    %387 = vmatprep.subr.mxu0 0.0
    %388 = vmatpush1.msra.mxu0 0.0
    %389 = vmatprep.subr.mxu0 0.0
    %390 = vmatpush1.msra.mxu0 0.0
    %391 = vmatprep.subr.mxu0 0.0
    %392 = vmatpush1.msra.mxu0 0.0
    %393 = vmatprep.subr.mxu0 0.0
    %394 = vmatpush1.msra.mxu0 0.0
    %395 = vmatprep.subr.mxu0 0.0
    %396 = vmatpush1.msra.mxu0 0.0
    %397 = vmatprep.mubr.f32.mxu0 0.0
    %398 = vmatmul.mubr.f32.gmra.mrb[0].mxu0 %v168
    %v399 = vpop.f32.mrb[0].mxu0
    %v400 = vadd.f32 0.0, %v399
    %v401 = vpop.f32.mrb[0].mxu0
    %402 = vmatprep.mubr.f32.mxu0 0.0
    %403 = vmatmul.mubr.f32.gmra.mrb[0].mxu0 %v171
    %v404 = vpop.f32.mrb[0].mxu0
    %v405 = vadd.f32 0.0, %v404
    %v406 = vpop.f32.mrb[0].mxu0
    %407 = vdwg.mxu0
    %v408 = vld [vmem:[%s3] sm:$0x1]
    %v410 = vlaneseq
    %v411 = vshrl.u32 %v410, 7
    %v412 = vsub.s32 0, %v411
    %v413 = vrot.slane %v408, %v412
    %v415 = vmul.f32 %v413, %v248
    %v416 = vmul.f32 %v413, %v249
    %v417 = vmul.f32 %v415, %v400
    %v418 = vmul.f32 %v416, %v405
    %v419 = vld [vmem:[%s4] sm:$0x1]
    %v421 = vlaneseq
    %v422 = vshrl.u32 %v421, 7
    %v423 = vsub.s32 0, %v422
    %v424 = vrot.slane %v419, %v423
    %v426 = vadd.f32 %v417, %v424
    %v427 = vadd.f32 %v418, %v424
    %vm428 = vcmask 261120
    %429 = vst.msk [vmem:[#allocation2] sm:$0xff] %vm428, %v426
    %430 = vst.msk [vmem:[#allocation2 + $0x8] sm:$0xff] %vm428, %v427
    // Predicated region
    $region26: #{tpu_custom_call.1} parent=1 // pred_check
      _
    $region27: #{tpu_custom_call.1} parent=1 // pred_check_branch
      %432 = sbr.rel (0) target = $region29
    $region28: #{tpu_custom_call.1} parent=1 // pred_region
      %s434 = ssub.s32 256, 256
      %435 = vsyncadd [#allocation3], %s434
      %s436 = sshll.u32 [#allocation2], 4
      %s437 = int_to_ptr.vmem [resolvable:$true] %s436
      %442 = dma.vmem_to_hbm [thread:$0]  %s437, 256, %s6, [#allocation3], 128, 128, 8
    $region29: #{tpu_custom_call.1} parent=1 // pred_fallthru
      _
    // Predicated region
    $region30: #{tpu_custom_call.1} parent=1 // pred_check
      _
    $region31: #{tpu_custom_call.1} parent=1 // pred_check_branch
      %444 = sbr.rel (0) target = $region33
    $region32: #{tpu_custom_call.1} parent=1 // pred_region
      %445 = dma.done [#allocation3], 256
    $region33: #{tpu_custom_call.1} parent=1 // pred_fallthru
      _
    %446 = vsyncpa [#allocation3], 1

</llo_original>
